<compile_context>
chip_gen: v5e
topology: v5e:2x2
jax: 0.10.0
libtpu: 0.0.40
codegen_flags: <defaults>
</compile_context>

<pallas_src>
import functools

import jax
import jax.numpy as jnp
import numpy as np
from jax.experimental import pallas as pl
from jax.experimental.pallas import tpu as pltpu

BN_EPS = 1e-3


def _round_up(n, m):
    return ((n + m - 1) // m) * m


def _bn_relu(h, bias, gamma, beta):
    """bias-add + BatchNorm1d (batch stats, biased var, eps=1e-3) + ReLU (f32)."""
    h = h + bias
    mu = jnp.mean(h, axis=0, keepdims=True)
    var = jnp.mean((h - mu) * (h - mu), axis=0, keepdims=True)
    scale = gamma * jax.lax.rsqrt(var + BN_EPS)   # fold BN affine into scale/shift
    shift = beta - mu * scale
    return jnp.maximum(h * scale + shift, 0.0)


def delta_topic_encoder_kernel(
    x_ref, y_ref, eps_ref,
    w1x_ref, w1y_ref, ws1_ref, ws2_ref, wh_ref, bh_ref, vecs_ref,
    qm_ref, qv_ref, lat_ref,
    hx_acc, hy_acc,
    *, nkx, nky, nk,
):
    k = pl.program_id(0)

    @pl.when(k == 0)
    def _init():
        hx_acc[...] = jnp.zeros_like(hx_acc)
        hy_acc[...] = jnp.zeros_like(hy_acc)

    def acc_x():
        # log(1 + x) in f32, cast to bf16 for the MXU (weights already bf16).
        x_l = jnp.log1p(x_ref[...].astype(jnp.float32)).astype(jnp.bfloat16)
        hx_acc[...] += jnp.dot(x_l, w1x_ref[...], preferred_element_type=jnp.float32)

    def acc_y():
        y_l = jnp.log1p(y_ref[...].astype(jnp.float32)).astype(jnp.bfloat16)
        hy_acc[...] += jnp.dot(y_l, w1y_ref[...], preferred_element_type=jnp.float32)

    # Skip accumulation past each input's own K extent (its BlockSpec index_map
    # is clamped so no extra HBM traffic is issued either).
    if nkx == nk:
        acc_x()
    else:
        pl.when(k < nkx)(acc_x)
    if nky == nk:
        acc_y()
    else:
        pl.when(k < nky)(acc_y)

    @pl.when(k == nk - 1)
    def _finalize():
        def row(i):  # [1, H] slice of the packed bias/gamma/beta table
            return vecs_ref[i:i + 1, :]

        # per-input encoders (Linear -> BN -> ReLU), combine_method == 'add'
        q_x = _bn_relu(hx_acc[...], row(0), row(1), row(2))
        q_y = _bn_relu(hy_acc[...], row(3), row(4), row(5))
        q = ((q_x + q_y) * 0.5).astype(jnp.bfloat16)

        # shared encoder, 2 layers (Linear -> BN -> ReLU)
        h1 = jnp.dot(q, ws1_ref[...], preferred_element_type=jnp.float32)
        q = _bn_relu(h1, row(6), row(7), row(8)).astype(jnp.bfloat16)
        h2 = jnp.dot(q, ws2_ref[...], preferred_element_type=jnp.float32)
        q = _bn_relu(h2, row(9), row(10), row(11)).astype(jnp.bfloat16)

        # fused mean/var heads: one matmul into [B, 2*OP] (lane-dense halves)
        heads = jnp.dot(q, wh_ref[...], preferred_element_type=jnp.float32) + bh_ref[...]
        op = wh_ref.shape[1] // 2
        q_m = heads[:, :op]
        v_raw = heads[:, op:]
        # q_v = exp(clamp(v_raw, -4, 4) / 2); std = sqrt(q_v) = exp(clamp / 4)
        std = jnp.exp(jnp.clip(v_raw, -4.0, 4.0) * 0.25)
        q_v = std * std

        qm_ref[...] = q_m
        qv_ref[...] = q_v
        # reparameterize_gaussian: mu + sqrt(var) * N(0, 1)
        lat_ref[...] = q_m + std * eps_ref[...]


def _vmem_bytes_estimate(B, tk, H, OP):
    """Per-step VMEM estimate: double-buffered streams + resident buffers."""
    stream = 2 * (2 * B * tk * 2 + 2 * tk * H * 2)   # x,y (bf16) + W1x,W1y (bf16), 2-deep
    resident = (
        2 * H * H * 2            # Ws1, Ws2 (bf16)
        + H * (2 * OP) * 2       # fused head weights (bf16)
        + (2 * OP) * 4           # fused head bias (f32)
        + 12 * H * 4             # packed bias/gamma/beta (f32)
        + B * OP * 4             # eps (f32)
        + 3 * 2 * B * OP * 4     # three f32 outputs (counted double-buffered)
        + 2 * B * H * 4          # two f32 accumulators
    )
    return stream + resident


def _choose_k_tile(batch_hint, d_x, d_y, H, OP, *, vmem_budget=40 << 20, tk_cap=8192):
    """Largest lane-aligned K tile whose VMEM footprint fits the budget.

    Budget defaults to 40 MiB so the same tiling fits v7x (64 MiB physical)
    as well as v5e/v6e (128 MiB).
    """
    kmax = _round_up(max(d_x, d_y), 128)
    tk = min(_round_up(tk_cap, 128), kmax)
    while tk > 128 and _vmem_bytes_estimate(batch_hint, tk, H, OP) > vmem_budget:
        tk -= 128
    return max(tk, 128)


def prepare_params(params, *, batch_hint=128, vmem_budget=40 << 20):
    """One-time conversion of f32 params into the kernel layout.

    Call ONCE outside the hot path: the f32->bf16 casts, the K padding of the
    (potentially gene-count sized) first-layer weight matrices, the mean/var
    head fusion and the small-vector packing all happen here, so none of that
    HBM read+write traffic is repeated per forward call.
    """
    f32, bf16 = jnp.float32, jnp.bfloat16
    d_x, H = params["w1x"].shape
    d_y = params["w1y"].shape[0]
    O = params["wm"].shape[1]
    OP = _round_up(O, 128)                         # lane-dense output width

    TK = _choose_k_tile(batch_hint, d_x, d_y, H, OP, vmem_budget=vmem_budget)
    KPx = _round_up(d_x, TK)
    KPy = _round_up(d_y, TK)

    w1x = jnp.zeros((KPx, H), bf16).at[:d_x, :].set(params["w1x"].astype(bf16))
    w1y = jnp.zeros((KPy, H), bf16).at[:d_y, :].set(params["w1y"].astype(bf16))
    ws1 = params["ws1"].astype(bf16)
    ws2 = params["ws2"].astype(bf16)
    w_heads = (jnp.zeros((H, 2 * OP), bf16)
               .at[:, :O].set(params["wm"].astype(bf16))
               .at[:, OP:OP + O].set(params["wv"].astype(bf16)))
    b_heads = (jnp.zeros((1, 2 * OP), f32)
               .at[:, :O].set(params["bm"])
               .at[:, OP:OP + O].set(params["bv"]))

    # pack all 12 small per-layer vectors into one [12, H] array (single DMA)
    vecs = jnp.concatenate([
        params["b1x"], params["g1x"], params["be1x"],
        params["b1y"], params["g1y"], params["be1y"],
        params["bs1"], params["gs1"], params["bes1"],
        params["bs2"], params["gs2"], params["bes2"],
    ], axis=0)

    return dict(
        w1x=w1x, w1y=w1y, ws1=ws1, ws2=ws2, w_heads=w_heads, b_heads=b_heads,
        vecs=vecs,
        meta=dict(d_x=d_x, d_y=d_y, H=H, O=O, OP=OP, TK=TK, KPx=KPx, KPy=KPy),
    )


def delta_topic_encoder(x, y, eps, prep):
    """Forward pass. `prep` comes from prepare_params (weights already in kernel layout)."""
    m = prep["meta"]
    d_x, d_y, H, O, OP = m["d_x"], m["d_y"], m["H"], m["O"], m["OP"]
    TK, KPx, KPy = m["TK"], m["KPx"], m["KPy"]
    B = x.shape[0]
    f32, bf16 = jnp.float32, jnp.bfloat16

    nkx, nky = KPx // TK, KPy // TK
    nk = max(nkx, nky)

    # Per-call layout plumbing limited to the (cheap) activation side:
    # bf16 streams halve x/y HBM bytes; eps is padded to the lane-dense width.
    x_p = jnp.zeros((B, KPx), bf16).at[:, :d_x].set(x.astype(bf16))
    y_p = jnp.zeros((B, KPy), bf16).at[:, :d_y].set(y.astype(bf16))
    eps_p = jnp.zeros((B, OP), f32).at[:, :O].set(eps)

    def act_map(nki):
        # Clamp the shorter input to its last valid block so no padded tail /
        # |d_x - d_y| gap is streamed (unchanged block index => no re-fetch).
        if nki == nk:
            return lambda k: (0, k)
        last = nki - 1
        return lambda k: (0, jnp.minimum(k, last))

    def w_map(nki):
        if nki == nk:
            return lambda k: (k, 0)
        last = nki - 1
        return lambda k: (jnp.minimum(k, last), 0)

    def kept(*shape):  # block == full array, resident across the K grid axis
        return pl.BlockSpec(shape, lambda k, s=len(shape): (0,) * s)

    grid_spec = pltpu.PrefetchScalarGridSpec(
        num_scalar_prefetch=0,
        grid=(nk,),
        in_specs=[
            pl.BlockSpec((B, TK), act_map(nkx)),          # x (K-tiled, bf16)
            pl.BlockSpec((B, TK), act_map(nky)),          # y (K-tiled, bf16)
            kept(B, OP),                                  # eps
            pl.BlockSpec((TK, H), w_map(nkx)),            # W1x (K-tiled, pipelined)
            pl.BlockSpec((TK, H), w_map(nky)),            # W1y (K-tiled, pipelined)
            kept(H, H), kept(H, H),                       # Ws1, Ws2
            kept(H, 2 * OP), kept(1, 2 * OP),             # fused head W, b
            kept(12, H),                                  # packed bias/gamma/beta
        ],
        out_specs=[kept(B, OP), kept(B, OP), kept(B, OP)],
        scratch_shapes=[pltpu.VMEM((B, H), jnp.float32),  # hx accumulator
                        pltpu.VMEM((B, H), jnp.float32)], # hy accumulator
    )

    # vmem limit derived from the same estimate the tile size was chosen with
    # (this is a cap, not a reservation; actual usage stays within the budget).
    vmem_est = _vmem_bytes_estimate(B, TK, H, OP)
    vmem_limit = int(min(max(vmem_est + (8 << 20), 32 << 20), 96 << 20))

    kernel = functools.partial(delta_topic_encoder_kernel, nkx=nkx, nky=nky, nk=nk)
    out_shape = tuple(jax.ShapeDtypeStruct((B, OP), f32) for _ in range(3))

    qm_p, qv_p, lat_p = pl.pallas_call(
        kernel,
        out_shape=out_shape,
        grid_spec=grid_spec,
        compiler_params=pltpu.CompilerParams(
            dimension_semantics=("arbitrary",),          # K is a reduction axis
            vmem_limit_bytes=vmem_limit,
        ),
    )(x_p, y_p, eps_p, prep["w1x"], prep["w1y"], prep["ws1"], prep["ws2"],
      prep["w_heads"], prep["b_heads"], prep["vecs"])

    return qm_p[:, :O], qv_p[:, :O], lat_p[:, :O]


def delta_topic_encoder_ref(x, y, eps, params, matmul_dtype=jnp.float32):
    """Pure-JAX reference. matmul_dtype=bfloat16 mirrors the kernel's MXU/stream policy."""
    md = matmul_dtype

    def prep_in(v):  # mirror the kernel's bf16 activation streaming
        return v.astype(md).astype(jnp.float32) if md != jnp.float32 else v

    def mm(a, w):
        return jnp.dot(a.astype(md), w.astype(md), preferred_element_type=jnp.float32)

    def bn_relu(h, g, be):
        mu = jnp.mean(h, axis=0, keepdims=True)
        var = jnp.mean((h - mu) ** 2, axis=0, keepdims=True)
        return jnp.maximum((h - mu) * jax.lax.rsqrt(var + BN_EPS) * g + be, 0.0)

    x_l, y_l = jnp.log1p(prep_in(x)), jnp.log1p(prep_in(y))
    q_x = bn_relu(mm(x_l, params["w1x"]) + params["b1x"], params["g1x"], params["be1x"])
    q_y = bn_relu(mm(y_l, params["w1y"]) + params["b1y"], params["g1y"], params["be1y"])
    q = (q_x + q_y) * 0.5
    q = bn_relu(mm(q, params["ws1"]) + params["bs1"], params["gs1"], params["bes1"])
    q = bn_relu(mm(q, params["ws2"]) + params["bs2"], params["gs2"], params["bes2"])
    q_m = mm(q, params["wm"]) + params["bm"]
    q_v = jnp.exp(jnp.clip(mm(q, params["wv"]) + params["bv"], -4.0, 4.0) * 0.5)
    return q_m, q_v, q_m + jnp.sqrt(q_v) * eps


def init_params(key, d_x, d_y, n_hidden, n_output):
    """Deterministic synthetic parameter init (PyTorch-like scales)."""
    ks = jax.random.split(key, 8)

    def lin(k, d_in, d_out):
        bound = 1.0 / jnp.sqrt(d_in)
        kw, kb = jax.random.split(k)
        w = jax.random.uniform(kw, (d_in, d_out), jnp.float32, -bound, bound)
        b = jax.random.uniform(kb, (1, d_out), jnp.float32, -bound, bound)
        return w, b

    p = {}
    p["w1x"], p["b1x"] = lin(ks[0], d_x, n_hidden)
    p["w1y"], p["b1y"] = lin(ks[1], d_y, n_hidden)
    p["ws1"], p["bs1"] = lin(ks[2], n_hidden, n_hidden)
    p["ws2"], p["bs2"] = lin(ks[3], n_hidden, n_hidden)
    p["wm"], p["bm"] = lin(ks[4], n_hidden, n_output)
    p["wv"], p["bv"] = lin(ks[5], n_hidden, n_output)
    # BatchNorm affine params (PyTorch default init: weight=1, bias=0)
    for name in ("1x", "1y", "s1", "s2"):
        p["g" + name] = jnp.ones((1, n_hidden), jnp.float32)
        p["be" + name] = jnp.zeros((1, n_hidden), jnp.float32)
    return p


if __name__ == "__main__":
    B = 8            # batch
    D_X = 32         # n_input_list[0] (e.g. spliced counts)
    D_Y = 24         # n_input_list[1] (e.g. unspliced counts)
    N_HIDDEN = 32
    N_OUTPUT = 16

    key = jax.random.PRNGKey(0)
    kx, ky, keps, kp = jax.random.split(key, 4)

    # count-like non-negative inputs
    x = jax.random.uniform(kx, (B, D_X), jnp.float32, 0.0, 10.0)
    y = jax.random.uniform(ky, (B, D_Y), jnp.float32, 0.0, 10.0)
    eps = jax.random.normal(keps, (B, N_OUTPUT), jnp.float32)

    params = init_params(kp, D_X, D_Y, N_HIDDEN, N_OUTPUT)

    # One-time weight layout conversion (hoisted out of the per-call hot path),
    # then the forward is jitted with the prepared weights closed over.
    prep = prepare_params(params, batch_hint=B)
    encode = jax.jit(functools.partial(delta_topic_encoder, prep=prep))

    q_m, q_v, latent = encode(x, y, eps)
    jax.block_until_ready((q_m, q_v, latent))

    assert q_m.shape == (B, N_OUTPUT)
    assert q_v.shape == (B, N_OUTPUT)
    assert latent.shape == (B, N_OUTPUT)
    assert bool(jnp.all(q_v > 0.0))
    assert bool(jnp.all(jnp.isfinite(latent)))

    # correctness vs. a pure-JAX reference using the same bf16 matmul/stream policy
    rm, rv, rl = delta_topic_encoder_ref(x, y, eps, params, matmul_dtype=jnp.bfloat16)
    np.testing.assert_allclose(np.asarray(q_m), np.asarray(rm), rtol=3e-2, atol=3e-2)
    np.testing.assert_allclose(np.asarray(q_v), np.asarray(rv), rtol=3e-2, atol=3e-2)
    np.testing.assert_allclose(np.asarray(latent), np.asarray(rl), rtol=3e-2, atol=3e-2)

    print("KERNEL_OK")
</pallas_src>

<mosaic_0001>
module attributes {stable_mosaic.version = 11 : i64} {
  func.func @delta_topic_encoder_kernel(%arg0: i32, %arg1: memref<8x128xbf16, #tpu.memory_space<vmem>>, %arg2: memref<8x128xbf16, #tpu.memory_space<vmem>>, %arg3: memref<8x128xf32, #tpu.memory_space<vmem>>, %arg4: memref<128x32xbf16, #tpu.memory_space<vmem>>, %arg5: memref<128x32xbf16, #tpu.memory_space<vmem>>, %arg6: memref<32x32xbf16, #tpu.memory_space<vmem>>, %arg7: memref<32x32xbf16, #tpu.memory_space<vmem>>, %arg8: memref<32x256xbf16, #tpu.memory_space<vmem>>, %arg9: memref<1x256xf32, #tpu.memory_space<vmem>>, %arg10: memref<12x32xf32, #tpu.memory_space<vmem>>, %arg11: memref<8x128xf32, #tpu.memory_space<vmem>>, %arg12: memref<8x128xf32, #tpu.memory_space<vmem>>, %arg13: memref<8x128xf32, #tpu.memory_space<vmem>>, %arg14: memref<8x32xf32, #tpu.memory_space<vmem>>, %arg15: memref<8x32xf32, #tpu.memory_space<vmem>>) attributes {dimension_semantics = [#tpu.dimension_semantics<arbitrary>], iteration_bounds = array<i64: 1>, scalar_prefetch = 0 : i64, scratch_operands = 2 : i64, tpu.core_type = #tpu.core_type<tc>, window_params = [{transform_indices = @transform_0, window_bounds = array<i64: 8, 128>}, {transform_indices = @transform_1, window_bounds = array<i64: 8, 128>}, {pipeline_mode = #tpu.pipeline_mode<synchronous>, transform_indices = @transform_2, window_bounds = array<i64: 8, 128>}, {transform_indices = @transform_3, window_bounds = array<i64: 128, 32>}, {transform_indices = @transform_4, window_bounds = array<i64: 128, 32>}, {pipeline_mode = #tpu.pipeline_mode<synchronous>, transform_indices = @transform_5, window_bounds = array<i64: 32, 32>}, {pipeline_mode = #tpu.pipeline_mode<synchronous>, transform_indices = @transform_6, window_bounds = array<i64: 32, 32>}, {pipeline_mode = #tpu.pipeline_mode<synchronous>, transform_indices = @transform_7, window_bounds = array<i64: 32, 256>}, {pipeline_mode = #tpu.pipeline_mode<synchronous>, transform_indices = @transform_8, window_bounds = array<i64: 1, 256>}, {pipeline_mode = #tpu.pipeline_mode<synchronous>, transform_indices = @transform_9, window_bounds = array<i64: 12, 32>}, {pipeline_mode = #tpu.pipeline_mode<synchronous>, transform_indices = @transform_10, window_bounds = array<i64: 8, 128>}, {pipeline_mode = #tpu.pipeline_mode<synchronous>, transform_indices = @transform_11, window_bounds = array<i64: 8, 128>}, {pipeline_mode = #tpu.pipeline_mode<synchronous>, transform_indices = @transform_12, window_bounds = array<i64: 8, 128>}]} {
    %c0_i32 = arith.constant 0 : i32
    %0 = arith.cmpi eq, %arg0, %c0_i32 : i32
    %1 = arith.extui %0 : i1 to i32
    %c0_i32_0 = arith.constant 0 : i32
    %2 = arith.cmpi ne, %1, %c0_i32_0 : i32
    scf.if %2 {
      %cst_19 = arith.constant 0.000000e+00 : f32
      %24 = vector.broadcast %cst_19 : f32 to vector<8x32xf32>
      %c0_20 = arith.constant 0 : index
      %c0_21 = arith.constant 0 : index
      %25 = vector.load %arg14[%c0_20, %c0_21] : memref<8x32xf32, #tpu.memory_space<vmem>>, vector<8x32xf32>
      tpu.vector_store %arg14[%c0_20, %c0_21], %24 {strides = array<i32>} : memref<8x32xf32, #tpu.memory_space<vmem>>, vector<8x32xf32>,
      %cst_22 = arith.constant 0.000000e+00 : f32
      %26 = vector.broadcast %cst_22 : f32 to vector<8x32xf32>
      %c0_23 = arith.constant 0 : index
      %c0_24 = arith.constant 0 : index
      %27 = vector.load %arg15[%c0_23, %c0_24] : memref<8x32xf32, #tpu.memory_space<vmem>>, vector<8x32xf32>
      tpu.vector_store %arg15[%c0_23, %c0_24], %26 {strides = array<i32>} : memref<8x32xf32, #tpu.memory_space<vmem>>, vector<8x32xf32>,
    } else {
    }
    %c0 = arith.constant 0 : index
    %c0_1 = arith.constant 0 : index
    %3 = vector.load %arg1[%c0, %c0_1] : memref<8x128xbf16, #tpu.memory_space<vmem>>, vector<8x128xbf16>
    %4 = arith.extf %3 : vector<8x128xbf16> to vector<8x128xf32>
    %5 = math.log1p %4 : vector<8x128xf32>
    %6 = arith.truncf %5 : vector<8x128xf32> to vector<8x128xbf16>
    %c0_2 = arith.constant 0 : index
    %c0_3 = arith.constant 0 : index
    %7 = vector.load %arg14[%c0_2, %c0_3] : memref<8x32xf32, #tpu.memory_space<vmem>>, vector<8x32xf32>
    %c0_4 = arith.constant 0 : index
    %c0_5 = arith.constant 0 : index
    %8 = vector.load %arg4[%c0_4, %c0_5] : memref<128x32xbf16, #tpu.memory_space<vmem>>, vector<128x32xbf16>
    %cst = arith.constant dense<0.000000e+00> : vector<8x32xf32>
    %9 = tpu.matmul %6, %8, %cst {dimension_numbers = #tpu.dot_dimension_numbers<[1], [0], [0], [1], [0, 0, 1, 1], [], []>} : vector<8x128xbf16>, vector<128x32xbf16>, vector<8x32xf32> -> vector<8x32xf32>
    %10 = arith.addf %7, %9 : vector<8x32xf32>
    %c0_6 = arith.constant 0 : index
    %c0_7 = arith.constant 0 : index
    %11 = vector.load %arg14[%c0_6, %c0_7] : memref<8x32xf32, #tpu.memory_space<vmem>>, vector<8x32xf32>
    tpu.vector_store %arg14[%c0_6, %c0_7], %10 {strides = array<i32>} : memref<8x32xf32, #tpu.memory_space<vmem>>, vector<8x32xf32>,
    %c0_8 = arith.constant 0 : index
    %c0_9 = arith.constant 0 : index
    %12 = vector.load %arg2[%c0_8, %c0_9] : memref<8x128xbf16, #tpu.memory_space<vmem>>, vector<8x128xbf16>
    %13 = arith.extf %12 : vector<8x128xbf16> to vector<8x128xf32>
    %14 = math.log1p %13 : vector<8x128xf32>
    %15 = arith.truncf %14 : vector<8x128xf32> to vector<8x128xbf16>
    %c0_10 = arith.constant 0 : index
    %c0_11 = arith.constant 0 : index
    %16 = vector.load %arg15[%c0_10, %c0_11] : memref<8x32xf32, #tpu.memory_space<vmem>>, vector<8x32xf32>
    %c0_12 = arith.constant 0 : index
    %c0_13 = arith.constant 0 : index
    %17 = vector.load %arg5[%c0_12, %c0_13] : memref<128x32xbf16, #tpu.memory_space<vmem>>, vector<128x32xbf16>
    %cst_14 = arith.constant dense<0.000000e+00> : vector<8x32xf32>
    %18 = tpu.matmul %15, %17, %cst_14 {dimension_numbers = #tpu.dot_dimension_numbers<[1], [0], [0], [1], [0, 0, 1, 1], [], []>} : vector<8x128xbf16>, vector<128x32xbf16>, vector<8x32xf32> -> vector<8x32xf32>
    %19 = arith.addf %16, %18 : vector<8x32xf32>
    %c0_15 = arith.constant 0 : index
    %c0_16 = arith.constant 0 : index
    %20 = vector.load %arg15[%c0_15, %c0_16] : memref<8x32xf32, #tpu.memory_space<vmem>>, vector<8x32xf32>
    tpu.vector_store %arg15[%c0_15, %c0_16], %19 {strides = array<i32>} : memref<8x32xf32, #tpu.memory_space<vmem>>, vector<8x32xf32>,
    %c0_i32_17 = arith.constant 0 : i32
    %21 = arith.cmpi eq, %arg0, %c0_i32_17 : i32
    %22 = arith.extui %21 : i1 to i32
    %c0_i32_18 = arith.constant 0 : i32
    %23 = arith.cmpi ne, %22, %c0_i32_18 : i32
    scf.if %23 {
      %c0_19 = arith.constant 0 : index
      %c0_20 = arith.constant 0 : index
      %24 = vector.load %arg14[%c0_19, %c0_20] : memref<8x32xf32, #tpu.memory_space<vmem>>, vector<8x32xf32>
      %c0_21 = arith.constant 0 : index
      %c0_22 = arith.constant 0 : index
      %25 = vector.load %arg10[%c0_21, %c0_22] : memref<12x32xf32, #tpu.memory_space<vmem>>, vector<1x32xf32>
      %c1 = arith.constant 1 : index
      %c0_23 = arith.constant 0 : index
      %26 = vector.load %arg10[%c1, %c0_23] : memref<12x32xf32, #tpu.memory_space<vmem>>, vector<1x32xf32>
      %c2 = arith.constant 2 : index
      %c0_24 = arith.constant 0 : index
      %27 = vector.load %arg10[%c2, %c0_24] : memref<12x32xf32, #tpu.memory_space<vmem>>, vector<1x32xf32>
      %28 = vector.broadcast %25 : vector<1x32xf32> to vector<8x32xf32>
      %29 = arith.addf %24, %28 : vector<8x32xf32>
      %cst_25 = arith.constant dense<0.000000e+00> : vector<32xf32>
      %30 = vector.multi_reduction <add>, %29, %cst_25 [0] : vector<8x32xf32> to vector<32xf32>
      %31 = vector.shape_cast %30 : vector<32xf32> to vector<1x32xf32>
      %cst_26 = arith.constant 8.000000e+00 : f32
      %32 = vector.broadcast %cst_26 : f32 to vector<1x32xf32>
      %33 = arith.divf %31, %32 : vector<1x32xf32>
      %34 = vector.broadcast %33 : vector<1x32xf32> to vector<8x32xf32>
      %35 = arith.subf %29, %34 : vector<8x32xf32>
      %36 = vector.broadcast %33 : vector<1x32xf32> to vector<8x32xf32>
      %37 = arith.subf %29, %36 : vector<8x32xf32>
      %38 = arith.mulf %35, %37 : vector<8x32xf32>
      %cst_27 = arith.constant dense<0.000000e+00> : vector<32xf32>
      %39 = vector.multi_reduction <add>, %38, %cst_27 [0] : vector<8x32xf32> to vector<32xf32>
      %40 = vector.shape_cast %39 : vector<32xf32> to vector<1x32xf32>
      %cst_28 = arith.constant 8.000000e+00 : f32
      %41 = vector.broadcast %cst_28 : f32 to vector<1x32xf32>
      %42 = arith.divf %40, %41 : vector<1x32xf32>
      %cst_29 = arith.constant 1.000000e-03 : f32
      %43 = vector.broadcast %cst_29 : f32 to vector<1x32xf32>
      %44 = arith.addf %42, %43 : vector<1x32xf32>
      %45 = math.rsqrt %44 : vector<1x32xf32>
      %46 = arith.mulf %26, %45 : vector<1x32xf32>
      %47 = arith.mulf %33, %46 : vector<1x32xf32>
      %48 = arith.subf %27, %47 : vector<1x32xf32>
      %49 = vector.broadcast %46 : vector<1x32xf32> to vector<8x32xf32>
      %50 = arith.mulf %29, %49 : vector<8x32xf32>
      %51 = vector.broadcast %48 : vector<1x32xf32> to vector<8x32xf32>
      %52 = arith.addf %50, %51 : vector<8x32xf32>
      %cst_30 = arith.constant 0.000000e+00 : f32
      %53 = vector.broadcast %cst_30 : f32 to vector<8x32xf32>
      %54 = arith.maximumf %52, %53 : vector<8x32xf32>
      %c0_31 = arith.constant 0 : index
      %c0_32 = arith.constant 0 : index
      %55 = vector.load %arg15[%c0_31, %c0_32] : memref<8x32xf32, #tpu.memory_space<vmem>>, vector<8x32xf32>
      %c3 = arith.constant 3 : index
      %c0_33 = arith.constant 0 : index
      %56 = vector.load %arg10[%c3, %c0_33] : memref<12x32xf32, #tpu.memory_space<vmem>>, vector<1x32xf32>
      %c4 = arith.constant 4 : index
      %c0_34 = arith.constant 0 : index
      %57 = vector.load %arg10[%c4, %c0_34] : memref<12x32xf32, #tpu.memory_space<vmem>>, vector<1x32xf32>
      %c5 = arith.constant 5 : index
      %c0_35 = arith.constant 0 : index
      %58 = vector.load %arg10[%c5, %c0_35] : memref<12x32xf32, #tpu.memory_space<vmem>>, vector<1x32xf32>
      %59 = vector.broadcast %56 : vector<1x32xf32> to vector<8x32xf32>
      %60 = arith.addf %55, %59 : vector<8x32xf32>
      %cst_36 = arith.constant dense<0.000000e+00> : vector<32xf32>
      %61 = vector.multi_reduction <add>, %60, %cst_36 [0] : vector<8x32xf32> to vector<32xf32>
      %62 = vector.shape_cast %61 : vector<32xf32> to vector<1x32xf32>
      %cst_37 = arith.constant 8.000000e+00 : f32
      %63 = vector.broadcast %cst_37 : f32 to vector<1x32xf32>
      %64 = arith.divf %62, %63 : vector<1x32xf32>
      %65 = vector.broadcast %64 : vector<1x32xf32> to vector<8x32xf32>
      %66 = arith.subf %60, %65 : vector<8x32xf32>
      %67 = vector.broadcast %64 : vector<1x32xf32> to vector<8x32xf32>
      %68 = arith.subf %60, %67 : vector<8x32xf32>
      %69 = arith.mulf %66, %68 : vector<8x32xf32>
      %cst_38 = arith.constant dense<0.000000e+00> : vector<32xf32>
      %70 = vector.multi_reduction <add>, %69, %cst_38 [0] : vector<8x32xf32> to vector<32xf32>
      %71 = vector.shape_cast %70 : vector<32xf32> to vector<1x32xf32>
      %cst_39 = arith.constant 8.000000e+00 : f32
      %72 = vector.broadcast %cst_39 : f32 to vector<1x32xf32>
      %73 = arith.divf %71, %72 : vector<1x32xf32>
      %cst_40 = arith.constant 1.000000e-03 : f32
      %74 = vector.broadcast %cst_40 : f32 to vector<1x32xf32>
      %75 = arith.addf %73, %74 : vector<1x32xf32>
      %76 = math.rsqrt %75 : vector<1x32xf32>
      %77 = arith.mulf %57, %76 : vector<1x32xf32>
      %78 = arith.mulf %64, %77 : vector<1x32xf32>
      %79 = arith.subf %58, %78 : vector<1x32xf32>
      %80 = vector.broadcast %77 : vector<1x32xf32> to vector<8x32xf32>
      %81 = arith.mulf %60, %80 : vector<8x32xf32>
      %82 = vector.broadcast %79 : vector<1x32xf32> to vector<8x32xf32>
      %83 = arith.addf %81, %82 : vector<8x32xf32>
      %cst_41 = arith.constant 0.000000e+00 : f32
      %84 = vector.broadcast %cst_41 : f32 to vector<8x32xf32>
      %85 = arith.maximumf %83, %84 : vector<8x32xf32>
      %86 = arith.addf %54, %85 : vector<8x32xf32>
      %cst_42 = arith.constant 5.000000e-01 : f32
      %87 = vector.broadcast %cst_42 : f32 to vector<8x32xf32>
      %88 = arith.mulf %86, %87 : vector<8x32xf32>
      %89 = arith.truncf %88 : vector<8x32xf32> to vector<8x32xbf16>
      %c0_43 = arith.constant 0 : index
      %c0_44 = arith.constant 0 : index
      %90 = vector.load %arg6[%c0_43, %c0_44] : memref<32x32xbf16, #tpu.memory_space<vmem>>, vector<32x32xbf16>
      %cst_45 = arith.constant dense<0.000000e+00> : vector<8x32xf32>
      %91 = tpu.matmul %89, %90, %cst_45 {dimension_numbers = #tpu.dot_dimension_numbers<[1], [0], [0], [1], [0, 0, 1, 1], [], []>} : vector<8x32xbf16>, vector<32x32xbf16>, vector<8x32xf32> -> vector<8x32xf32>
      %c6 = arith.constant 6 : index
      %c0_46 = arith.constant 0 : index
      %92 = vector.load %arg10[%c6, %c0_46] : memref<12x32xf32, #tpu.memory_space<vmem>>, vector<1x32xf32>
      %c7 = arith.constant 7 : index
      %c0_47 = arith.constant 0 : index
      %93 = vector.load %arg10[%c7, %c0_47] : memref<12x32xf32, #tpu.memory_space<vmem>>, vector<1x32xf32>
      %c8 = arith.constant 8 : index
      %c0_48 = arith.constant 0 : index
      %94 = vector.load %arg10[%c8, %c0_48] : memref<12x32xf32, #tpu.memory_space<vmem>>, vector<1x32xf32>
      %95 = vector.broadcast %92 : vector<1x32xf32> to vector<8x32xf32>
      %96 = arith.addf %91, %95 : vector<8x32xf32>
      %cst_49 = arith.constant dense<0.000000e+00> : vector<32xf32>
      %97 = vector.multi_reduction <add>, %96, %cst_49 [0] : vector<8x32xf32> to vector<32xf32>
      %98 = vector.shape_cast %97 : vector<32xf32> to vector<1x32xf32>
      %cst_50 = arith.constant 8.000000e+00 : f32
      %99 = vector.broadcast %cst_50 : f32 to vector<1x32xf32>
      %100 = arith.divf %98, %99 : vector<1x32xf32>
      %101 = vector.broadcast %100 : vector<1x32xf32> to vector<8x32xf32>
      %102 = arith.subf %96, %101 : vector<8x32xf32>
      %103 = vector.broadcast %100 : vector<1x32xf32> to vector<8x32xf32>
      %104 = arith.subf %96, %103 : vector<8x32xf32>
      %105 = arith.mulf %102, %104 : vector<8x32xf32>
      %cst_51 = arith.constant dense<0.000000e+00> : vector<32xf32>
      %106 = vector.multi_reduction <add>, %105, %cst_51 [0] : vector<8x32xf32> to vector<32xf32>
      %107 = vector.shape_cast %106 : vector<32xf32> to vector<1x32xf32>
      %cst_52 = arith.constant 8.000000e+00 : f32
      %108 = vector.broadcast %cst_52 : f32 to vector<1x32xf32>
      %109 = arith.divf %107, %108 : vector<1x32xf32>
      %cst_53 = arith.constant 1.000000e-03 : f32
      %110 = vector.broadcast %cst_53 : f32 to vector<1x32xf32>
      %111 = arith.addf %109, %110 : vector<1x32xf32>
      %112 = math.rsqrt %111 : vector<1x32xf32>
      %113 = arith.mulf %93, %112 : vector<1x32xf32>
      %114 = arith.mulf %100, %113 : vector<1x32xf32>
      %115 = arith.subf %94, %114 : vector<1x32xf32>
      %116 = vector.broadcast %113 : vector<1x32xf32> to vector<8x32xf32>
      %117 = arith.mulf %96, %116 : vector<8x32xf32>
      %118 = vector.broadcast %115 : vector<1x32xf32> to vector<8x32xf32>
      %119 = arith.addf %117, %118 : vector<8x32xf32>
      %cst_54 = arith.constant 0.000000e+00 : f32
      %120 = vector.broadcast %cst_54 : f32 to vector<8x32xf32>
      %121 = arith.maximumf %119, %120 : vector<8x32xf32>
      %122 = arith.truncf %121 : vector<8x32xf32> to vector<8x32xbf16>
      %c0_55 = arith.constant 0 : index
      %c0_56 = arith.constant 0 : index
      %123 = vector.load %arg7[%c0_55, %c0_56] : memref<32x32xbf16, #tpu.memory_space<vmem>>, vector<32x32xbf16>
      %cst_57 = arith.constant dense<0.000000e+00> : vector<8x32xf32>
      %124 = tpu.matmul %122, %123, %cst_57 {dimension_numbers = #tpu.dot_dimension_numbers<[1], [0], [0], [1], [0, 0, 1, 1], [], []>} : vector<8x32xbf16>, vector<32x32xbf16>, vector<8x32xf32> -> vector<8x32xf32>
      %c9 = arith.constant 9 : index
      %c0_58 = arith.constant 0 : index
      %125 = vector.load %arg10[%c9, %c0_58] : memref<12x32xf32, #tpu.memory_space<vmem>>, vector<1x32xf32>
      %c10 = arith.constant 10 : index
      %c0_59 = arith.constant 0 : index
      %126 = vector.load %arg10[%c10, %c0_59] : memref<12x32xf32, #tpu.memory_space<vmem>>, vector<1x32xf32>
      %c11 = arith.constant 11 : index
      %c0_60 = arith.constant 0 : index
      %127 = vector.load %arg10[%c11, %c0_60] : memref<12x32xf32, #tpu.memory_space<vmem>>, vector<1x32xf32>
      %128 = vector.broadcast %125 : vector<1x32xf32> to vector<8x32xf32>
      %129 = arith.addf %124, %128 : vector<8x32xf32>
      %cst_61 = arith.constant dense<0.000000e+00> : vector<32xf32>
      %130 = vector.multi_reduction <add>, %129, %cst_61 [0] : vector<8x32xf32> to vector<32xf32>
      %131 = vector.shape_cast %130 : vector<32xf32> to vector<1x32xf32>
      %cst_62 = arith.constant 8.000000e+00 : f32
      %132 = vector.broadcast %cst_62 : f32 to vector<1x32xf32>
      %133 = arith.divf %131, %132 : vector<1x32xf32>
      %134 = vector.broadcast %133 : vector<1x32xf32> to vector<8x32xf32>
      %135 = arith.subf %129, %134 : vector<8x32xf32>
      %136 = vector.broadcast %133 : vector<1x32xf32> to vector<8x32xf32>
      %137 = arith.subf %129, %136 : vector<8x32xf32>
      %138 = arith.mulf %135, %137 : vector<8x32xf32>
      %cst_63 = arith.constant dense<0.000000e+00> : vector<32xf32>
      %139 = vector.multi_reduction <add>, %138, %cst_63 [0] : vector<8x32xf32> to vector<32xf32>
      %140 = vector.shape_cast %139 : vector<32xf32> to vector<1x32xf32>
      %cst_64 = arith.constant 8.000000e+00 : f32
      %141 = vector.broadcast %cst_64 : f32 to vector<1x32xf32>
      %142 = arith.divf %140, %141 : vector<1x32xf32>
      %cst_65 = arith.constant 1.000000e-03 : f32
      %143 = vector.broadcast %cst_65 : f32 to vector<1x32xf32>
      %144 = arith.addf %142, %143 : vector<1x32xf32>
      %145 = math.rsqrt %144 : vector<1x32xf32>
      %146 = arith.mulf %126, %145 : vector<1x32xf32>
      %147 = arith.mulf %133, %146 : vector<1x32xf32>
      %148 = arith.subf %127, %147 : vector<1x32xf32>
      %149 = vector.broadcast %146 : vector<1x32xf32> to vector<8x32xf32>
      %150 = arith.mulf %129, %149 : vector<8x32xf32>
      %151 = vector.broadcast %148 : vector<1x32xf32> to vector<8x32xf32>
      %152 = arith.addf %150, %151 : vector<8x32xf32>
      %cst_66 = arith.constant 0.000000e+00 : f32
      %153 = vector.broadcast %cst_66 : f32 to vector<8x32xf32>
      %154 = arith.maximumf %152, %153 : vector<8x32xf32>
      %155 = arith.truncf %154 : vector<8x32xf32> to vector<8x32xbf16>
      %c0_67 = arith.constant 0 : index
      %c0_68 = arith.constant 0 : index
      %156 = vector.load %arg8[%c0_67, %c0_68] : memref<32x256xbf16, #tpu.memory_space<vmem>>, vector<32x256xbf16>
      %cst_69 = arith.constant dense<0.000000e+00> : vector<8x256xf32>
      %157 = tpu.matmul %155, %156, %cst_69 {dimension_numbers = #tpu.dot_dimension_numbers<[1], [0], [0], [1], [0, 0, 1, 1], [], []>} : vector<8x32xbf16>, vector<32x256xbf16>, vector<8x256xf32> -> vector<8x256xf32>
      %c0_70 = arith.constant 0 : index
      %c0_71 = arith.constant 0 : index
      %158 = vector.load %arg9[%c0_70, %c0_71] : memref<1x256xf32, #tpu.memory_space<vmem>>, vector<1x256xf32>
      %159 = vector.broadcast %158 : vector<1x256xf32> to vector<8x256xf32>
      %160 = arith.addf %157, %159 : vector<8x256xf32>
      %161 = vector.extract_strided_slice %160 {offsets = [0, 0], sizes = [8, 128], strides = [1, 1]} : vector<8x256xf32> to vector<8x128xf32>
      %162 = vector.extract_strided_slice %160 {offsets = [0, 128], sizes = [8, 128], strides = [1, 1]} : vector<8x256xf32> to vector<8x128xf32>
      %cst_72 = arith.constant -4.000000e+00 : f32
      %cst_73 = arith.constant 4.000000e+00 : f32
      %163 = vector.broadcast %cst_72 : f32 to vector<8x128xf32>
      %164 = arith.maximumf %163, %162 : vector<8x128xf32>
      %165 = vector.broadcast %cst_73 : f32 to vector<8x128xf32>
      %166 = arith.minimumf %165, %164 : vector<8x128xf32>
      %cst_74 = arith.constant 2.500000e-01 : f32
      %167 = vector.broadcast %cst_74 : f32 to vector<8x128xf32>
      %168 = arith.mulf %166, %167 : vector<8x128xf32>
      %169 = math.exp %168 : vector<8x128xf32>
      %170 = arith.mulf %169, %169 : vector<8x128xf32>
      %c0_75 = arith.constant 0 : index
      %c0_76 = arith.constant 0 : index
      %171 = vector.load %arg11[%c0_75, %c0_76] : memref<8x128xf32, #tpu.memory_space<vmem>>, vector<8x128xf32>
      tpu.vector_store %arg11[%c0_75, %c0_76], %161 {strides = array<i32>} : memref<8x128xf32, #tpu.memory_space<vmem>>, vector<8x128xf32>,
      %c0_77 = arith.constant 0 : index
      %c0_78 = arith.constant 0 : index
      %172 = vector.load %arg12[%c0_77, %c0_78] : memref<8x128xf32, #tpu.memory_space<vmem>>, vector<8x128xf32>
      tpu.vector_store %arg12[%c0_77, %c0_78], %170 {strides = array<i32>} : memref<8x128xf32, #tpu.memory_space<vmem>>, vector<8x128xf32>,
      %c0_79 = arith.constant 0 : index
      %c0_80 = arith.constant 0 : index
      %173 = vector.load %arg3[%c0_79, %c0_80] : memref<8x128xf32, #tpu.memory_space<vmem>>, vector<8x128xf32>
      %174 = arith.mulf %169, %173 : vector<8x128xf32>
      %175 = arith.addf %161, %174 : vector<8x128xf32>
      %c0_81 = arith.constant 0 : index
      %c0_82 = arith.constant 0 : index
      %176 = vector.load %arg13[%c0_81, %c0_82] : memref<8x128xf32, #tpu.memory_space<vmem>>, vector<8x128xf32>
      tpu.vector_store %arg13[%c0_81, %c0_82], %175 {strides = array<i32>} : memref<8x128xf32, #tpu.memory_space<vmem>>, vector<8x128xf32>,
    } else {
    }
    return
  }
  func.func @transform_0(%arg0: i32) -> (i32, i32) {
    %c0_i32 = arith.constant 0 : i32
    %c0_i32_0 = arith.constant 0 : i32
    return %c0_i32, %arg0 : i32, i32
  }
  func.func @transform_1(%arg0: i32) -> (i32, i32) {
    %c0_i32 = arith.constant 0 : i32
    %c0_i32_0 = arith.constant 0 : i32
    return %c0_i32, %arg0 : i32, i32
  }
  func.func @transform_2(%arg0: i32) -> (i32, i32) {
    %c0_i32 = arith.constant 0 : i32
    %c0_i32_0 = arith.constant 0 : i32
    %c0_i32_1 = arith.constant 0 : i32
    return %c0_i32, %c0_i32_0 : i32, i32
  }
  func.func @transform_3(%arg0: i32) -> (i32, i32) {
    %c0_i32 = arith.constant 0 : i32
    %c0_i32_0 = arith.constant 0 : i32
    return %arg0, %c0_i32 : i32, i32
  }
  func.func @transform_4(%arg0: i32) -> (i32, i32) {
    %c0_i32 = arith.constant 0 : i32
    %c0_i32_0 = arith.constant 0 : i32
    return %arg0, %c0_i32 : i32, i32
  }
  func.func @transform_5(%arg0: i32) -> (i32, i32) {
    %c0_i32 = arith.constant 0 : i32
    %c0_i32_0 = arith.constant 0 : i32
    %c0_i32_1 = arith.constant 0 : i32
    return %c0_i32, %c0_i32_0 : i32, i32
  }
  func.func @transform_6(%arg0: i32) -> (i32, i32) {
    %c0_i32 = arith.constant 0 : i32
    %c0_i32_0 = arith.constant 0 : i32
    %c0_i32_1 = arith.constant 0 : i32
    return %c0_i32, %c0_i32_0 : i32, i32
  }
  func.func @transform_7(%arg0: i32) -> (i32, i32) {
    %c0_i32 = arith.constant 0 : i32
    %c0_i32_0 = arith.constant 0 : i32
    %c0_i32_1 = arith.constant 0 : i32
    return %c0_i32, %c0_i32_0 : i32, i32
  }
  func.func @transform_8(%arg0: i32) -> (i32, i32) {
    %c0_i32 = arith.constant 0 : i32
    %c0_i32_0 = arith.constant 0 : i32
    %c0_i32_1 = arith.constant 0 : i32
    return %c0_i32, %c0_i32_0 : i32, i32
  }
  func.func @transform_9(%arg0: i32) -> (i32, i32) {
    %c0_i32 = arith.constant 0 : i32
    %c0_i32_0 = arith.constant 0 : i32
    %c0_i32_1 = arith.constant 0 : i32
    return %c0_i32, %c0_i32_0 : i32, i32
  }
  func.func @transform_10(%arg0: i32) -> (i32, i32) {
    %c0_i32 = arith.constant 0 : i32
    %c0_i32_0 = arith.constant 0 : i32
    %c0_i32_1 = arith.constant 0 : i32
    return %c0_i32, %c0_i32_0 : i32, i32
  }
  func.func @transform_11(%arg0: i32) -> (i32, i32) {
    %c0_i32 = arith.constant 0 : i32
    %c0_i32_0 = arith.constant 0 : i32
    %c0_i32_1 = arith.constant 0 : i32
    return %c0_i32, %c0_i32_0 : i32, i32
  }
  func.func @transform_12(%arg0: i32) -> (i32, i32) {
    %c0_i32 = arith.constant 0 : i32
    %c0_i32_0 = arith.constant 0 : i32
    %c0_i32_1 = arith.constant 0 : i32
    return %c0_i32, %c0_i32_0 : i32, i32
  }
}

</mosaic_0001>

<llo_original>
// kernel: delta_topic_encoder.1
$region0: #{delta_topic_encoder.1}
  #allocation0 [shape = 'u32[]', space=smem, size = 0x4, offset = 0x4, fixed_abs, tag = 'smem constant byte address 0x4 - core index']
  #allocation1 [shape = 'u32[72,128]{1,0:T(1,128)}', space=vmem, size = 0x9000, scoped, tag = 'internal scratch']
  #allocation2 [shape = 'f32[8,32]{1,0:T(8,128)}', space=vmem, size = 0x1000, scoped, tag = 'scratch operand']
  #allocation3 [shape = 'f32[8,32]{1,0:T(8,128)}', space=vmem, size = 0x1000, scoped, tag = 'scratch operand']
  %s0 = inlined_call_operand.vmem [shape: bf16[8,128], index: 0, kind: input, shape index: {}]
  %s1 = inlined_call_operand.vmem [shape: bf16[8,128], index: 1, kind: input, shape index: {}]
  %s2 = inlined_call_operand.vmem [shape: f32[8,128], index: 2, kind: input, shape index: {}]
  %s3 = inlined_call_operand.hbm [shape: bf16[128,32], index: 3, kind: input, shape index: {}]
  %s4 = inlined_call_operand.hbm [shape: bf16[128,32], index: 4, kind: input, shape index: {}]
  %s5 = inlined_call_operand.hbm [shape: bf16[32,32], index: 5, kind: input, shape index: {}]
  %s6 = inlined_call_operand.vmem [shape: bf16[32,32], index: 6, kind: input, shape index: {}]
  %s7 = inlined_call_operand.vmem [shape: bf16[32,256], index: 7, kind: input, shape index: {}]
  %s8 = inlined_call_operand.vmem [shape: f32[1,256], index: 8, kind: input, shape index: {}]
  %s9 = inlined_call_operand.vmem [shape: f32[12,32], index: 9, kind: input, shape index: {}]
  %s10 = inlined_call_operand.hbm [shape: f32[8,128], index: 10, kind: output, shape index: {0}]
  %s11 = inlined_call_operand.hbm [shape: f32[8,128], index: 11, kind: output, shape index: {1}]
  %s12 = inlined_call_operand.hbm [shape: f32[8,128], index: 12, kind: output, shape index: {2}]
  %13 = xla_tuple %s10, %s11, %s12
  %s14 = sld [smem:[#allocation0]]
  $region86: #{delta_topic_encoder.1} parent=0
    _
  %s16 = ssub.s32 1, %s14
  %s17 = scalar_select 0, %s16, %s14
  $region1: #{delta_topic_encoder.1} parent=0
    #allocation4 [shape = 'u8[32768]{0}', space=vmem, size = 0x8000, scoped, tag = 'input window, operand 3, single buffered']
    #allocation5 [shape = 's32[1]{0}', space=sflag, size = 0x4, scoped, tag = 'scoped memory for delta_topic_encoder.1']
    #allocation6 [shape = 's32[1]{0}', space=sflag, size = 0x4, scoped, tag = 'scoped memory for delta_topic_encoder.1']
    #allocation7 [shape = 'u8[32768]{0}', space=vmem, size = 0x8000, scoped, tag = 'input window, operand 4, single buffered']
    #allocation8 [shape = 's32[1]{0}', space=sflag, size = 0x4, scoped, tag = 'scoped memory for delta_topic_encoder.1']
    #allocation9 [shape = 'u8[8192]{0}', space=vmem, size = 0x2000, scoped, tag = 'input window, operand 5, single buffered']
    #allocation10 [shape = 'u8[4096]{0}', space=vmem, size = 0x1000, scoped, tag = 'output window, operand 0, single buffered']
    #allocation11 [shape = 'u8[4096]{0}', space=vmem, size = 0x1000, scoped, tag = 'output window, operand 1, single buffered']
    #allocation12 [shape = 's32[1]{0}', space=sflag, size = 0x4, scoped, tag = 'scoped memory for delta_topic_encoder.1']
    #allocation13 [shape = 'u8[4096]{0}', space=vmem, size = 0x1000, scoped, tag = 'output window, operand 2, single buffered']
    %18 = vsyncpa [#allocation5], 0
    %19 = vsyncpa [#allocation8], 0
    %20 = vsyncpa [#allocation6], 0
    %21 = vsyncpa [#allocation12], 0
    // Predicated region
    $region2: #{delta_topic_encoder.1} parent=1 // pred_check
      _
    $region3: #{delta_topic_encoder.1} parent=1 // pred_check_branch
      %23 = sbr.rel (0) target = $region5
    $region4: #{delta_topic_encoder.1} parent=1 // pred_region
      _
    $region5: #{delta_topic_encoder.1} parent=1 // pred_fallthru
      _
    // Predicated region
    $region6: #{delta_topic_encoder.1} parent=1 // pred_check
      _
    $region7: #{delta_topic_encoder.1} parent=1 // pred_check_branch
      %25 = sbr.rel (0) target = $region9
    $region8: #{delta_topic_encoder.1} parent=1 // pred_region
      _
    $region9: #{delta_topic_encoder.1} parent=1 // pred_fallthru
      _
    // Predicated region
    $region10: #{delta_topic_encoder.1} parent=1 // pred_check
      _
    $region11: #{delta_topic_encoder.1} parent=1 // pred_check_branch
      %27 = sbr.rel (0) target = $region13
    $region12: #{delta_topic_encoder.1} parent=1 // pred_region
      _
    $region13: #{delta_topic_encoder.1} parent=1 // pred_fallthru
      _
    // Predicated region
    $region14: #{delta_topic_encoder.1} parent=1 // pred_check
      _
    $region15: #{delta_topic_encoder.1} parent=1 // pred_check_branch
      %29 = sbr.rel (0) target = $region17
    $region16: #{delta_topic_encoder.1} parent=1 // pred_region
      %31 = vsyncadd [#allocation5], 0
      %s32 = sshll.u32 %s3, 4
      %s33 = int_to_ptr.hbm [resolvable:$true] %s32
      %s34 = sshll.u32 [#allocation4], 4
      %s35 = int_to_ptr.vmem [resolvable:$true] %s34
      %40 = dma.hbm_to_vmem [thread:$0]  %s33, 1024, %s35, [#allocation5], 64, 64, 4
    $region17: #{delta_topic_encoder.1} parent=1 // pred_fallthru
      _
    // Predicated region
    $region18: #{delta_topic_encoder.1} parent=1 // pred_check
      _
    $region19: #{delta_topic_encoder.1} parent=1 // pred_check_branch
      %42 = sbr.rel (0) target = $region21
    $region20: #{delta_topic_encoder.1} parent=1 // pred_region
      %44 = vsyncadd [#allocation8], 0
      %s45 = sshll.u32 %s4, 4
      %s46 = int_to_ptr.hbm [resolvable:$true] %s45
      %s47 = sshll.u32 [#allocation7], 4
      %s48 = int_to_ptr.vmem [resolvable:$true] %s47
      %53 = dma.hbm_to_vmem [thread:$0]  %s46, 1024, %s48, [#allocation8], 64, 64, 4
    $region21: #{delta_topic_encoder.1} parent=1 // pred_fallthru
      _
    // Predicated region
    $region22: #{delta_topic_encoder.1} parent=1 // pred_check
      _
    $region23: #{delta_topic_encoder.1} parent=1 // pred_check_branch
      %55 = sbr.rel (0) target = $region25
    $region24: #{delta_topic_encoder.1} parent=1 // pred_region
      %57 = vsyncadd [#allocation8], 0
      %s58 = sshll.u32 %s5, 4
      %s59 = int_to_ptr.hbm [resolvable:$true] %s58
      %s60 = sshll.u32 [#allocation9], 4
      %s61 = int_to_ptr.vmem [resolvable:$true] %s60
      %66 = dma.hbm_to_vmem [thread:$0]  %s59, 256, %s61, [#allocation8], 64, 64, 4
    $region25: #{delta_topic_encoder.1} parent=1 // pred_fallthru
      _
    // Predicated region
    $region26: #{delta_topic_encoder.1} parent=1 // pred_check
      _
    $region27: #{delta_topic_encoder.1} parent=1 // pred_check_branch
      %68 = sbr.rel (0) target = $region29
    $region28: #{delta_topic_encoder.1} parent=1 // pred_region
      _
    $region29: #{delta_topic_encoder.1} parent=1 // pred_fallthru
      _
    // Predicated region
    $region30: #{delta_topic_encoder.1} parent=1 // pred_check
      _
    $region31: #{delta_topic_encoder.1} parent=1 // pred_check_branch
      %70 = sbr.rel (0) target = $region33
    $region32: #{delta_topic_encoder.1} parent=1 // pred_region
      _
    $region33: #{delta_topic_encoder.1} parent=1 // pred_fallthru
      _
    // Predicated region
    $region34: #{delta_topic_encoder.1} parent=1 // pred_check
      _
    $region35: #{delta_topic_encoder.1} parent=1 // pred_check_branch
      %72 = sbr.rel (0) target = $region37
    $region36: #{delta_topic_encoder.1} parent=1 // pred_region
      _
    $region37: #{delta_topic_encoder.1} parent=1 // pred_fallthru
      _
    // Predicated region
    $region38: #{delta_topic_encoder.1} parent=1 // pred_check
      _
    $region39: #{delta_topic_encoder.1} parent=1 // pred_check_branch
      %74 = sbr.rel (0) target = $region41
    $region40: #{delta_topic_encoder.1} parent=1 // pred_region
      _
    $region41: #{delta_topic_encoder.1} parent=1 // pred_fallthru
      _
    // Predicated region
    $region42: #{delta_topic_encoder.1} parent=1 // pred_check
      _
    $region43: #{delta_topic_encoder.1} parent=1 // pred_check_branch
      %76 = sbr.rel (0) target = $region45
    $region44: #{delta_topic_encoder.1} parent=1 // pred_region
      %78 = dma.done [#allocation5], 1024
    $region45: #{delta_topic_encoder.1} parent=1 // pred_fallthru
      _
    // Predicated region
    $region46: #{delta_topic_encoder.1} parent=1 // pred_check
      _
    $region47: #{delta_topic_encoder.1} parent=1 // pred_check_branch
      %80 = sbr.rel (0) target = $region49
    $region48: #{delta_topic_encoder.1} parent=1 // pred_region
      %82 = dma.done [#allocation8], 1024
    $region49: #{delta_topic_encoder.1} parent=1 // pred_fallthru
      _
    // Predicated region
    $region50: #{delta_topic_encoder.1} parent=1 // pred_check
      _
    $region51: #{delta_topic_encoder.1} parent=1 // pred_check_branch
      %84 = sbr.rel (0) target = $region53
    $region52: #{delta_topic_encoder.1} parent=1 // pred_region
      %86 = dma.done [#allocation8], 256
    $region53: #{delta_topic_encoder.1} parent=1 // pred_fallthru
      _
    %p88 = scmp.eq.s32.totalorder 0, 0
    // Predicated region
    $region54: #{delta_topic_encoder.1} parent=1 // pred_check
      %p89 = pneg %p88
    $region55: #{delta_topic_encoder.1} parent=1 // pred_check_branch
      %91 = sbr.rel (%p89) target = $region57
    $region56: #{delta_topic_encoder.1} parent=1 // pred_region
      %vm92 = vcmask 261120
      %93 = vst.msk [vmem:[#allocation2] sm:$0xff] %vm92, 0.0
      %94 = vst.msk [vmem:[#allocation3] sm:$0xff] %vm92, 0.0
    $region57: #{delta_topic_encoder.1} parent=1 // pred_fallthru
      _
    %v95 = vld [vmem:[%s0] sm:$0xf]
    %v96 = vunpack.c.l.bf16 %v95
    %v97 = vadd.f32 %v96, 1.0
    %v98 = vlog2.pop %v97
    %v99 = vmul.f32 %v98, 0.6931472
    %v100 = vmul.f32 -0.5, %v96
    %v101 = vadd.f32 %v100, 1.0
    %v102 = vmul.f32 %v101, %v96
    %v103 = vand.u32 2147483647, %v96
    %vm104 = vcmp.lt.f32.partialorder %v103, 0.0004427343
    %v105 = vsel %vm104, %v102, %v99
    %v106 = vpack.c.bf16 %v105, %v105
    %v107 = vld [vmem:[#allocation2] sm:$0xff]
    %v108 = vld [vmem:[#allocation4] sm:$0xf]
    %v109 = vld [vmem:[#allocation4 + $0x4] sm:$0xf]
    %v110 = vld [vmem:[#allocation4 + $0x8] sm:$0xf]
    %v111 = vld [vmem:[#allocation4 + $0xc] sm:$0xf]
    %v112 = vld [vmem:[#allocation4 + $0x10] sm:$0xf]
    %v113 = vld [vmem:[#allocation4 + $0x14] sm:$0xf]
    %v114 = vld [vmem:[#allocation4 + $0x18] sm:$0xf]
    %v115 = vld [vmem:[#allocation4 + $0x1c] sm:$0xf]
    %v116 = vld [vmem:[#allocation4 + $0x20] sm:$0xf]
    %v117 = vld [vmem:[#allocation4 + $0x24] sm:$0xf]
    %v118 = vld [vmem:[#allocation4 + $0x28] sm:$0xf]
    %v119 = vld [vmem:[#allocation4 + $0x2c] sm:$0xf]
    %v120 = vld [vmem:[#allocation4 + $0x30] sm:$0xf]
    %v121 = vld [vmem:[#allocation4 + $0x34] sm:$0xf]
    %v122 = vld [vmem:[#allocation4 + $0x38] sm:$0xf]
    %v123 = vld [vmem:[#allocation4 + $0x3c] sm:$0xf]
    %v140 = vunpack.c.l.b16 %v108
    %v141 = vunpack.c.l.b16 %v109
    %v142 = vunpack.c.l.b16 %v110
    %v143 = vunpack.c.l.b16 %v111
    %v144 = vunpack.c.l.b16 %v112
    %v145 = vunpack.c.l.b16 %v113
    %v146 = vunpack.c.l.b16 %v114
    %v147 = vunpack.c.l.b16 %v115
    %v148 = vunpack.c.l.b16 %v116
    %v149 = vunpack.c.l.b16 %v117
    %v150 = vunpack.c.l.b16 %v118
    %v151 = vunpack.c.l.b16 %v119
    %v152 = vunpack.c.l.b16 %v120
    %v153 = vunpack.c.l.b16 %v121
    %v154 = vunpack.c.l.b16 %v122
    %v155 = vunpack.c.l.b16 %v123
    %v156 = vpack.c.b16 %v141, %v140
    %v157 = vpack.c.b16 %v143, %v142
    %v158 = vpack.c.b16 %v145, %v144
    %v159 = vpack.c.b16 %v147, %v146
    %v160 = vpack.c.b16 %v149, %v148
    %v161 = vpack.c.b16 %v151, %v150
    %v162 = vpack.c.b16 %v153, %v152
    %v163 = vpack.c.b16 %v155, %v154
    %172 = vmatpush.bf16.msra.mxu0 %v163
    %173 = vmatpush.bf16.msra.mxu0 %v162
    %174 = vmatpush.bf16.msra.mxu0 %v161
    %175 = vmatpush.bf16.msra.mxu0 %v160
    %176 = vmatpush.bf16.msra.mxu0 %v159
    %177 = vmatpush.bf16.msra.mxu0 %v158
    %178 = vmatpush.bf16.msra.mxu0 %v157
    %179 = vmatpush.bf16.msra.mxu0 %v156
    %180 = vmatmul.bf16.gmra.mxu0 %v106
    %v181 = vpop.f32.mrf.mxu0
    %v182 = vadd.f32 0.0, %v181
    %v183 = vpop.f32.mrf.mxu0
    %184 = vdwg.mxu0
    %v185 = vadd.f32 %v107, %v182
    %vm186 = vcmask 261120
    %187 = vst.msk [vmem:[#allocation2] sm:$0xff] %vm186, %v185
    %v188 = vld [vmem:[%s1] sm:$0xf]
    %v189 = vunpack.c.l.bf16 %v188
    %v190 = vadd.f32 %v189, 1.0
    %v191 = vlog2.pop %v190
    %v192 = vmul.f32 %v191, 0.6931472
    %v193 = vmul.f32 -0.5, %v189
    %v194 = vadd.f32 %v193, 1.0
    %v195 = vmul.f32 %v194, %v189
    %v196 = vand.u32 2147483647, %v189
    %vm197 = vcmp.lt.f32.partialorder %v196, 0.0004427343
    %v198 = vsel %vm197, %v195, %v192
    %v199 = vpack.c.bf16 %v198, %v198
    %v200 = vld [vmem:[#allocation3] sm:$0xff]
    %v201 = vld [vmem:[#allocation7] sm:$0xf]
    %v202 = vld [vmem:[#allocation7 + $0x4] sm:$0xf]
    %v203 = vld [vmem:[#allocation7 + $0x8] sm:$0xf]
    %v204 = vld [vmem:[#allocation7 + $0xc] sm:$0xf]
    %v205 = vld [vmem:[#allocation7 + $0x10] sm:$0xf]
    %v206 = vld [vmem:[#allocation7 + $0x14] sm:$0xf]
    %v207 = vld [vmem:[#allocation7 + $0x18] sm:$0xf]
    %v208 = vld [vmem:[#allocation7 + $0x1c] sm:$0xf]
    %v209 = vld [vmem:[#allocation7 + $0x20] sm:$0xf]
    %v210 = vld [vmem:[#allocation7 + $0x24] sm:$0xf]
    %v211 = vld [vmem:[#allocation7 + $0x28] sm:$0xf]
    %v212 = vld [vmem:[#allocation7 + $0x2c] sm:$0xf]
    %v213 = vld [vmem:[#allocation7 + $0x30] sm:$0xf]
    %v214 = vld [vmem:[#allocation7 + $0x34] sm:$0xf]
    %v215 = vld [vmem:[#allocation7 + $0x38] sm:$0xf]
    %v216 = vld [vmem:[#allocation7 + $0x3c] sm:$0xf]
    %v233 = vunpack.c.l.b16 %v201
    %v234 = vunpack.c.l.b16 %v202
    %v235 = vunpack.c.l.b16 %v203
    %v236 = vunpack.c.l.b16 %v204
    %v237 = vunpack.c.l.b16 %v205
    %v238 = vunpack.c.l.b16 %v206
    %v239 = vunpack.c.l.b16 %v207
    %v240 = vunpack.c.l.b16 %v208
    %v241 = vunpack.c.l.b16 %v209
    %v242 = vunpack.c.l.b16 %v210
    %v243 = vunpack.c.l.b16 %v211
    %v244 = vunpack.c.l.b16 %v212
    %v245 = vunpack.c.l.b16 %v213
    %v246 = vunpack.c.l.b16 %v214
    %v247 = vunpack.c.l.b16 %v215
    %v248 = vunpack.c.l.b16 %v216
    %v249 = vpack.c.b16 %v234, %v233
    %v250 = vpack.c.b16 %v236, %v235
    %v251 = vpack.c.b16 %v238, %v237
    %v252 = vpack.c.b16 %v240, %v239
    %v253 = vpack.c.b16 %v242, %v241
    %v254 = vpack.c.b16 %v244, %v243
    %v255 = vpack.c.b16 %v246, %v245
    %v256 = vpack.c.b16 %v248, %v247
    %265 = vmatpush.bf16.msra.mxu0 %v256
    %266 = vmatpush.bf16.msra.mxu0 %v255
    %267 = vmatpush.bf16.msra.mxu0 %v254
    %268 = vmatpush.bf16.msra.mxu0 %v253
    %269 = vmatpush.bf16.msra.mxu0 %v252
    %270 = vmatpush.bf16.msra.mxu0 %v251
    %271 = vmatpush.bf16.msra.mxu0 %v250
    %272 = vmatpush.bf16.msra.mxu0 %v249
    %273 = vmatmul.bf16.gmra.mxu0 %v199
    %v274 = vpop.f32.mrf.mxu0
    %v275 = vadd.f32 0.0, %v274
    %v276 = vpop.f32.mrf.mxu0
    %277 = vdwg.mxu0
    %v278 = vadd.f32 %v200, %v275
    %279 = vst.msk [vmem:[#allocation3] sm:$0xff] %vm186, %v278
    // Predicated region
    $region58: #{delta_topic_encoder.1} parent=1 // pred_check
      %p280 = pneg %p88
    $region59: #{delta_topic_encoder.1} parent=1 // pred_check_branch
      %282 = sbr.rel (%p280) target = $region61
    $region60: #{delta_topic_encoder.1} parent=1 // pred_region
      %v283 = vld [vmem:[#allocation2] sm:$0xff]
      %v284 = vld [vmem:[%s9] sm:$0x1]
      %v285 = vld [vmem:[%s9 + $0x1] sm:$0x1]
      %v286 = vld [vmem:[%s9 + $0x2] sm:$0x1]
      %v287 = vperm.slane %v284, 0
      %v288 = vadd.f32 %v283, %v287
      %v289 = vsel %vm186, %v288, 0.0
      %v290 = vrot.slane %v289, 4
      %v291 = vadd.f32 %v289, %v290
      %v292 = vrot.slane %v291, 2
      %v293 = vadd.f32 %v291, %v292
      %v294 = vrot.slane %v293, 1
      %v295 = vadd.f32 %v293, %v294
      %v296 = vrcp.pop 8.0
      %v297 = vmul.f32 8.0, %v296
      %v298 = vsub.f32 1.0, %v297
      %v299 = vmul.f32 %v296, %v298
      %v300 = vadd.f32 %v296, %v299
      %vm301 = vweird.f32 %v296
      %v302 = vsel %vm301, %v296, %v300
      %v303 = vmul.f32 %v295, %v302
      %v304 = vsub.f32 %v288, %v303
      %v305 = vmul.f32 %v304, %v304
      %v306 = vsel %vm186, %v305, 0.0
      %v307 = vrot.slane %v306, 4
      %v308 = vadd.f32 %v306, %v307
      %v309 = vrot.slane %v308, 2
      %v310 = vadd.f32 %v308, %v309
      %v311 = vrot.slane %v310, 1
      %v312 = vadd.f32 %v310, %v311
      %v313 = vmul.f32 %v312, %v302
      %v314 = vadd.f32 %v313, 0.001
      %v315 = vrsqrt.pop %v314
      %v316 = vmul.f32 %v315, %v314
      %v317 = vmul.f32 %v316, %v315
      %v318 = vmul.f32 0.5, %v317
      %v319 = vsub.f32 1.5, %v318
      %v320 = vmul.f32 %v315, %v319
      %vm321 = vweird.f32 %v314
      %vm322 = vweird.f32 %v315
      %vm323 = vmor %vm321, %vm322
      %v324 = vsel %vm323, %v315, %v320
      %v325 = vmul.f32 %v285, %v324
      %v326 = vmul.f32 %v303, %v325
      %v327 = vsub.f32 %v286, %v326
      %v328 = vperm.slane %v325, 0
      %v329 = vmul.f32 %v288, %v328
      %v330 = vperm.slane %v327, 0
      %v331 = vadd.f32 %v329, %v330
      %v332 = vmax.f32 %v331, 0.0
      %v333 = vld [vmem:[#allocation3] sm:$0xff]
      %v334 = vld [vmem:[%s9 + $0x3] sm:$0x1]
      %v335 = vld [vmem:[%s9 + $0x4] sm:$0x1]
      %v336 = vld [vmem:[%s9 + $0x5] sm:$0x1]
      %v337 = vperm.slane %v334, 0
      %v338 = vadd.f32 %v333, %v337
      %v339 = vsel %vm186, %v338, 0.0
      %v340 = vrot.slane %v339, 4
      %v341 = vadd.f32 %v339, %v340
      %v342 = vrot.slane %v341, 2
      %v343 = vadd.f32 %v341, %v342
      %v344 = vrot.slane %v343, 1
      %v345 = vadd.f32 %v343, %v344
      %v346 = vmul.f32 %v345, %v302
      %v347 = vsub.f32 %v338, %v346
      %v348 = vmul.f32 %v347, %v347
      %v349 = vsel %vm186, %v348, 0.0
      %v350 = vrot.slane %v349, 4
      %v351 = vadd.f32 %v349, %v350
      %v352 = vrot.slane %v351, 2
      %v353 = vadd.f32 %v351, %v352
      %v354 = vrot.slane %v353, 1
      %v355 = vadd.f32 %v353, %v354
      %v356 = vmul.f32 %v355, %v302
      %v357 = vadd.f32 %v356, 0.001
      %v358 = vrsqrt.pop %v357
      %v359 = vmul.f32 %v358, %v357
      %v360 = vmul.f32 %v359, %v358
      %v361 = vmul.f32 0.5, %v360
      %v362 = vsub.f32 1.5, %v361
      %v363 = vmul.f32 %v358, %v362
      %vm364 = vweird.f32 %v357
      %vm365 = vweird.f32 %v358
      %vm366 = vmor %vm364, %vm365
      %v367 = vsel %vm366, %v358, %v363
      %v368 = vmul.f32 %v335, %v367
      %v369 = vmul.f32 %v346, %v368
      %v370 = vsub.f32 %v336, %v369
      %v371 = vperm.slane %v368, 0
      %v372 = vmul.f32 %v338, %v371
      %v373 = vperm.slane %v370, 0
      %v374 = vadd.f32 %v372, %v373
      %v375 = vmax.f32 %v374, 0.0
      %v376 = vadd.f32 %v332, %v375
      %v377 = vmul.f32 %v376, 0.5
      %v378 = vpack.c.bf16 %v377, %v377
      %v379 = vld [vmem:[#allocation9] sm:$0xf]
      %v380 = vld [vmem:[#allocation9 + $0x4] sm:$0xf]
      %v381 = vld [vmem:[#allocation9 + $0x8] sm:$0xf]
      %v382 = vld [vmem:[#allocation9 + $0xc] sm:$0xf]
      %v383 = vld [vmem:[%s9 + $0x6] sm:$0x1]
      %v384 = vld [vmem:[%s9 + $0x7] sm:$0x1]
      %v385 = vld [vmem:[%s9 + $0x8] sm:$0x1]
      %v386 = vperm.slane %v383, 0
      %v391 = vunpack.c.l.b16 %v379
      %v392 = vunpack.c.l.b16 %v380
      %v393 = vunpack.c.l.b16 %v381
      %v394 = vunpack.c.l.b16 %v382
      %v395 = vpack.c.b16 %v392, %v391
      %v396 = vpack.c.b16 %v394, %v393
      %v400 = vsel %vm186, %v378, 0
      %402 = vmatpush.bf16.msra.mxu0 0
      %403 = vmatpush.bf16.msra.mxu0 0
      %404 = vmatpush.bf16.msra.mxu0 0
      %405 = vmatpush.bf16.msra.mxu0 0
      %406 = vmatpush.bf16.msra.mxu0 0
      %407 = vmatpush.bf16.msra.mxu0 0
      %408 = vmatpush.bf16.msra.mxu0 %v396
      %409 = vmatpush.bf16.msra.mxu0 %v395
      %410 = vmatmul.bf16.gmra.mxu0 %v400
      %v411 = vpop.f32.mrf.mxu0
      %v412 = vadd.f32 %v386, %v411
      %v413 = vpop.f32.mrf.mxu0
      %414 = vdwg.mxu0
      %v415 = vsel %vm186, %v412, 0.0
      %v416 = vrot.slane %v415, 4
      %v417 = vadd.f32 %v415, %v416
      %v418 = vrot.slane %v417, 2
      %v419 = vadd.f32 %v417, %v418
      %v420 = vrot.slane %v419, 1
      %v421 = vadd.f32 %v419, %v420
      %v422 = vmul.f32 %v421, %v302
      %v423 = vsub.f32 %v412, %v422
      %v424 = vmul.f32 %v423, %v423
      %v425 = vsel %vm186, %v424, 0.0
      %v426 = vrot.slane %v425, 4
      %v427 = vadd.f32 %v425, %v426
      %v428 = vrot.slane %v427, 2
      %v429 = vadd.f32 %v427, %v428
      %v430 = vrot.slane %v429, 1
      %v431 = vadd.f32 %v429, %v430
      %v432 = vmul.f32 %v431, %v302
      %v433 = vadd.f32 %v432, 0.001
      %v434 = vrsqrt.pop %v433
      %v435 = vmul.f32 %v434, %v433
      %v436 = vmul.f32 %v435, %v434
      %v437 = vmul.f32 0.5, %v436
      %v438 = vsub.f32 1.5, %v437
      %v439 = vmul.f32 %v434, %v438
      %vm440 = vweird.f32 %v433
      %vm441 = vweird.f32 %v434
      %vm442 = vmor %vm440, %vm441
      %v443 = vsel %vm442, %v434, %v439
      %v444 = vmul.f32 %v384, %v443
      %v445 = vmul.f32 %v422, %v444
      %v446 = vsub.f32 %v385, %v445
      %v447 = vperm.slane %v444, 0
      %v448 = vmul.f32 %v412, %v447
      %v449 = vperm.slane %v446, 0
      %v450 = vadd.f32 %v448, %v449
      %v451 = vmax.f32 %v450, 0.0
      %v452 = vpack.c.bf16 %v451, %v451
      %v453 = vld [vmem:[%s6] sm:$0xf]
      %v454 = vld [vmem:[%s6 + $0x4] sm:$0xf]
      %v455 = vld [vmem:[%s6 + $0x8] sm:$0xf]
      %v456 = vld [vmem:[%s6 + $0xc] sm:$0xf]
      %v457 = vld [vmem:[%s9 + $0x9] sm:$0x1]
      %v458 = vld [vmem:[%s9 + $0xa] sm:$0x1]
      %v459 = vld [vmem:[%s9 + $0xb] sm:$0x1]
      %v460 = vperm.slane %v457, 0
      %v465 = vunpack.c.l.b16 %v453
      %v466 = vunpack.c.l.b16 %v454
      %v467 = vunpack.c.l.b16 %v455
      %v468 = vunpack.c.l.b16 %v456
      %v469 = vpack.c.b16 %v466, %v465
      %v470 = vpack.c.b16 %v468, %v467
      %v474 = vsel %vm186, %v452, 0
      %476 = vmatpush.bf16.msra.mxu0 0
      %477 = vmatpush.bf16.msra.mxu0 0
      %478 = vmatpush.bf16.msra.mxu0 0
      %479 = vmatpush.bf16.msra.mxu0 0
      %480 = vmatpush.bf16.msra.mxu0 0
      %481 = vmatpush.bf16.msra.mxu0 0
      %482 = vmatpush.bf16.msra.mxu0 %v470
      %483 = vmatpush.bf16.msra.mxu0 %v469
      %484 = vmatmul.bf16.gmra.mxu0 %v474
      %v485 = vpop.f32.mrf.mxu0
      %v486 = vadd.f32 %v460, %v485
      %v487 = vpop.f32.mrf.mxu0
      %488 = vdwg.mxu0
      %v489 = vsel %vm186, %v486, 0.0
      %v490 = vrot.slane %v489, 4
      %v491 = vadd.f32 %v489, %v490
      %v492 = vrot.slane %v491, 2
      %v493 = vadd.f32 %v491, %v492
      %v494 = vrot.slane %v493, 1
      %v495 = vadd.f32 %v493, %v494
      %v496 = vmul.f32 %v495, %v302
      %v497 = vsub.f32 %v486, %v496
      %v498 = vmul.f32 %v497, %v497
      %v499 = vsel %vm186, %v498, 0.0
      %v500 = vrot.slane %v499, 4
      %v501 = vadd.f32 %v499, %v500
      %v502 = vrot.slane %v501, 2
      %v503 = vadd.f32 %v501, %v502
      %v504 = vrot.slane %v503, 1
      %v505 = vadd.f32 %v503, %v504
      %v506 = vmul.f32 %v505, %v302
      %v507 = vadd.f32 %v506, 0.001
      %v508 = vrsqrt.pop %v507
      %v509 = vmul.f32 %v508, %v507
      %v510 = vmul.f32 %v509, %v508
      %v511 = vmul.f32 0.5, %v510
      %v512 = vsub.f32 1.5, %v511
      %v513 = vmul.f32 %v508, %v512
      %vm514 = vweird.f32 %v507
      %vm515 = vweird.f32 %v508
      %vm516 = vmor %vm514, %vm515
      %v517 = vsel %vm516, %v508, %v513
      %v518 = vmul.f32 %v458, %v517
      %v519 = vmul.f32 %v496, %v518
      %v520 = vsub.f32 %v459, %v519
      %v521 = vperm.slane %v518, 0
      %v522 = vmul.f32 %v486, %v521
      %v523 = vperm.slane %v520, 0
      %v524 = vadd.f32 %v522, %v523
      %v525 = vmax.f32 %v524, 0.0
      %v526 = vpack.c.bf16 %v525, %v525
      %v527 = vld [vmem:[%s7] sm:$0xff]
      %v528 = vld [vmem:[%s7 + $0x8] sm:$0xff]
      %v529 = vld [vmem:[%s7 + $0x10] sm:$0xff]
      %v530 = vld [vmem:[%s7 + $0x18] sm:$0xff]
      %v531 = vld [vmem:[%s8] sm:$0x3]
      %v533 = vperm.slane %v531, 0
      %v534 = vperm.slane %v531, 1
      %v541 = vunpack.c.l.b16 %v527
      %v542 = vunpack.c.h.b16 %v527
      %v543 = vunpack.c.l.b16 %v528
      %v544 = vunpack.c.h.b16 %v528
      %v545 = vunpack.c.l.b16 %v529
      %v546 = vunpack.c.h.b16 %v529
      %v547 = vunpack.c.l.b16 %v530
      %v548 = vunpack.c.h.b16 %v530
      %v549 = vpack.c.b16 %v543, %v541
      %v550 = vpack.c.b16 %v544, %v542
      %v551 = vpack.c.b16 %v547, %v545
      %v552 = vpack.c.b16 %v548, %v546
      %v558 = vsel %vm186, %v526, 0
      %560 = vmatpush.bf16.msra.mxu0 0
      %561 = vmatpush.bf16.msra.mxu0 0
      %562 = vmatpush.bf16.msra.mxu0 0
      %563 = vmatpush.bf16.msra.mxu0 0
      %564 = vmatpush.bf16.msra.mxu0 0
      %565 = vmatpush.bf16.msra.mxu0 0
      %566 = vmatpush.bf16.msra.mxu0 %v551
      %567 = vmatpush.bf16.msra.mxu0 %v549
      %568 = vmatmul.bf16.gmra.mxu0 %v558
      %v569 = vpop.f32.mrf.mxu0
      %v570 = vadd.f32 %v533, %v569
      %v571 = vpop.f32.mrf.mxu0
      %572 = vdwg.mxu0
      %573 = vmatpush.bf16.msra.mxu0 0
      %574 = vmatpush.bf16.msra.mxu0 0
      %575 = vmatpush.bf16.msra.mxu0 0
      %576 = vmatpush.bf16.msra.mxu0 0
      %577 = vmatpush.bf16.msra.mxu0 0
      %578 = vmatpush.bf16.msra.mxu0 0
      %579 = vmatpush.bf16.msra.mxu0 %v552
      %580 = vmatpush.bf16.msra.mxu0 %v550
      %581 = vmatmul.bf16.gmra.mxu0 %v558
      %v582 = vpop.f32.mrf.mxu0
      %v583 = vadd.f32 %v534, %v582
      %v584 = vpop.f32.mrf.mxu0
      %585 = vdwg.mxu0
      %v586 = vmax.f32 %v583, -4.0
      %v587 = vmin.f32 %v586, 4.0
      %v588 = vmul.f32 %v587, 0.25
      %v589 = vmul.f32 %v588, 1.442695
      %v590 = vpow.pop %v589
      %v591 = vmul.f32 %v590, %v590
      %592 = vst [vmem:[#allocation10] sm:$0xff] %v570
      %593 = vst [vmem:[#allocation11] sm:$0xff] %v591
      %v594 = vld [vmem:[%s2] sm:$0xff]
      %v595 = vmul.f32 %v590, %v594
      %v596 = vadd.f32 %v570, %v595
      %597 = vst [vmem:[#allocation13] sm:$0xff] %v596
    $region61: #{delta_topic_encoder.1} parent=1 // pred_fallthru
      _
    // Predicated region
    $region62: #{delta_topic_encoder.1} parent=1 // pred_check
      _
    $region63: #{delta_topic_encoder.1} parent=1 // pred_check_branch
      %599 = sbr.rel (0) target = $region65
    $region64: #{delta_topic_encoder.1} parent=1 // pred_region
      %601 = vsyncadd [#allocation6], 0
      %s603 = sshll.u32 [#allocation10], 4
      %s604 = int_to_ptr.vmem [resolvable:$true] %s603
      %s605 = sshll.u32 %s10, 4
      %s606 = int_to_ptr.hbm [resolvable:$true] %s605
      %608 = dma.vmem_to_hbm [thread:$0]  %s604, 128, %s606, [#allocation6]
    $region65: #{delta_topic_encoder.1} parent=1 // pred_fallthru
      _
    // Predicated region
    $region66: #{delta_topic_encoder.1} parent=1 // pred_check
      _
    $region67: #{delta_topic_encoder.1} parent=1 // pred_check_branch
      %610 = sbr.rel (0) target = $region69
    $region68: #{delta_topic_encoder.1} parent=1 // pred_region
      %612 = vsyncadd [#allocation12], 0
      %s614 = sshll.u32 [#allocation11], 4
      %s615 = int_to_ptr.vmem [resolvable:$true] %s614
      %s616 = sshll.u32 %s11, 4
      %s617 = int_to_ptr.hbm [resolvable:$true] %s616
      %619 = dma.vmem_to_hbm [thread:$0]  %s615, 128, %s617, [#allocation12]
    $region69: #{delta_topic_encoder.1} parent=1 // pred_fallthru
      _
    // Predicated region
    $region70: #{delta_topic_encoder.1} parent=1 // pred_check
      _
    $region71: #{delta_topic_encoder.1} parent=1 // pred_check_branch
      %621 = sbr.rel (0) target = $region73
    $region72: #{delta_topic_encoder.1} parent=1 // pred_region
      %623 = vsyncadd [#allocation12], 0
      %s625 = sshll.u32 [#allocation13], 4
      %s626 = int_to_ptr.vmem [resolvable:$true] %s625
      %s627 = sshll.u32 %s12, 4
      %s628 = int_to_ptr.hbm [resolvable:$true] %s627
      %630 = dma.vmem_to_hbm [thread:$0]  %s626, 128, %s628, [#allocation12]
    $region73: #{delta_topic_encoder.1} parent=1 // pred_fallthru
      _
    // Predicated region
    $region74: #{delta_topic_encoder.1} parent=1 // pred_check
      _
    $region75: #{delta_topic_encoder.1} parent=1 // pred_check_branch
      %632 = sbr.rel (0) target = $region77
    $region76: #{delta_topic_encoder.1} parent=1 // pred_region
      %634 = dma.done [#allocation6], 128
    $region77: #{delta_topic_encoder.1} parent=1 // pred_fallthru
      _
    // Predicated region
    $region78: #{delta_topic_encoder.1} parent=1 // pred_check
      _
    $region79: #{delta_topic_encoder.1} parent=1 // pred_check_branch
      %636 = sbr.rel (0) target = $region81
    $region80: #{delta_topic_encoder.1} parent=1 // pred_region
      %638 = dma.done [#allocation12], 128
    $region81: #{delta_topic_encoder.1} parent=1 // pred_fallthru
      _
    // Predicated region
    $region82: #{delta_topic_encoder.1} parent=1 // pred_check
      _
    $region83: #{delta_topic_encoder.1} parent=1 // pred_check_branch
      %640 = sbr.rel (0) target = $region85
    $region84: #{delta_topic_encoder.1} parent=1 // pred_region
      %642 = dma.done [#allocation12], 128
    $region85: #{delta_topic_encoder.1} parent=1 // pred_fallthru
      _
    %643 = vsyncpa [#allocation5], 1
    %644 = vsyncpa [#allocation8], 1
    %645 = vsyncpa [#allocation6], 1
    %646 = vsyncpa [#allocation12], 1

</llo_original>
